<compile_context>
chip_gen: v7x
topology: tpu7x:2x2x1
jax: 0.10.0
libtpu: 0.0.40
codegen_flags: <defaults>
</compile_context>

<pallas_src>
import jax
import jax.numpy as jnp
from jax import lax
from jax.experimental import pallas as pl
from jax.experimental.pallas import tpu as pltpu


# ---------------------------------------------------------------------------
# Kernel: out = k_rec + (mask * w) * (k_ref - k_rec)
#   hard DC  -> w = 1                : (1-m)*k_rec + m*k_ref
#   soft DC  -> w = dc_weight        : (1-m)*k_rec + m*k_rec*(1-w) + m*k_ref*w
# ---------------------------------------------------------------------------
def _dc_kernel(w_ref, mask_ref, krec_ref, kref_ref, out_ref):
    krec = krec_ref[...]
    kref = kref_ref[...]
    w = w_ref[0, 0].astype(jnp.float32)              # scalar dc_weight (SMEM)
    mw = mask_ref[...].astype(jnp.float32) * w       # (tr, Lw) or (tr, L)

    tr, L = krec.shape
    Lw = mw.shape[-1]
    if Lw != L:
        # Compact mask: one value per W contiguous slab elements.  Expand on
        # the idle MXU: m_full = m_compact @ E with a 0/1 matrix (exact,
        # exactly one nonzero per output column).  VPU-only ops build E.
        W = L // Lw
        grp = lax.broadcasted_iota(jnp.int32, (Lw, L), 0)
        lane = lax.broadcasted_iota(jnp.int32, (Lw, L), 1)
        lo = grp * W
        expand = ((lane >= lo) & (lane < lo + W)).astype(jnp.float32)
        mw = jnp.dot(mw, expand, preferred_element_type=jnp.float32)

    out_ref[...] = krec + mw.astype(krec.dtype) * (kref - krec)


# ---------------------------------------------------------------------------
# Wrapper
# ---------------------------------------------------------------------------
def _default_tile_rows():
    """Largest row tile whose double-buffered footprint fits the default
    scoped-VMEM budget of the local chip (tuned for lane_width=512 f32)."""
    try:
        kind = jax.devices()[0].device_kind.lower()
    except Exception:
        return 512
    if "v6" in kind or "7x" in kind or "v7" in kind:
        return 2048      # ~24.5 MiB double-buffered < 32 MiB scoped default
    if "v5" in kind:
        return 1024      # ~12.3 MiB < 16 MiB scoped default
    return 512           # conservative for older / unknown parts


def dc_layer(k_rec, mask, k_ref, dc_weight=None, soft=False, *,
             lane_width=512, tile_rows=None, min_pallas_elems=1 << 21):
    """Pallas implementation of DC_layer.forward (k_rec, mask, k_ref)."""
    assert lane_width % 128 == 0
    compute_dtype = k_rec.dtype
    k_ref = k_ref.astype(compute_dtype)

    if soft:
        assert dc_weight is not None, "soft DC requires dc_weight (DC_type != '')"
        w_val = jnp.asarray(dc_weight, dtype=compute_dtype).reshape(())
    else:
        w_val = jnp.asarray(1.0, dtype=compute_dtype)

    # torch: single unsqueeze(-1) when mask has fewer dims than k_rec.
    mask_b = mask[..., None] if mask.ndim < k_rec.ndim else mask

    n = k_rec.size
    if n < min_pallas_elems:
        # Small tensors: one fused XLA pass beats pallas_call fixed overhead.
        m = mask_b.astype(compute_dtype)
        return (k_rec + (m * w_val) * (k_ref - k_rec)).astype(compute_dtype)

    # Pick a lane width that divides n if possible (avoids tail padding).
    L = lane_width
    if n % L != 0:
        for cand in (256, 128):
            if n % cand == 0:
                L = cand
                break

    rows = -(-n // L)                      # cdiv
    n_pad = rows * L

    if tile_rows is None:
        tile_rows = _default_tile_rows()
    tr = min(tile_rows, rows)
    if tr != rows and tr % 8 != 0:         # keep the (8,128) block guarantee
        tr = max(8, (tr // 8) * 8)

    def to_slab(x):
        x = x.reshape(-1).astype(compute_dtype)
        if n_pad != n:
            x = jnp.pad(x, (0, n_pad - n))
        return x.reshape(rows, L)

    krec2 = to_slab(k_rec)
    kref2 = to_slab(k_ref)

    # Compact-mask path: mask is a plain broadcast over the trailing axis.
    W = k_rec.shape[-1]
    compact = (
        mask_b.ndim == k_rec.ndim
        and mask_b.shape[-1] == 1
        and tuple(mask_b.shape[:-1]) == tuple(k_rec.shape[:-1])
        and L % W == 0
    )
    if compact:
        Lw = L // W
        g_total = n // W
        g_pad = rows * Lw
        mflat = mask_b.reshape(-1).astype(compute_dtype)
        if g_pad != g_total:
            mflat = jnp.pad(mflat, (0, g_pad - g_total))
        mask_slab = mflat.reshape(rows, Lw)
    else:
        # TODO(synk): generic broadcast path still materialises the full-size
        # mask in HBM; only hit when the mask is not a trailing-axis broadcast.
        mask_slab = to_slab(jnp.broadcast_to(mask_b, k_rec.shape))
        Lw = L

    grid = (pl.cdiv(rows, tr),)
    data_spec = pl.BlockSpec((tr, L), lambda i: (i, 0))
    mask_spec = pl.BlockSpec((tr, Lw), lambda i: (i, 0))

    itemsize = jnp.dtype(compute_dtype).itemsize
    cost = pl.CostEstimate(
        flops=3 * n_pad + (2 * Lw * n_pad if compact else 0),
        transcendentals=0,
        bytes_accessed=3 * n_pad * itemsize + mask_slab.size * itemsize,
    )
    # "parallel" lets the row grid shard across both v7x TensorCores.
    cparams = pltpu.CompilerParams(dimension_semantics=("parallel",))

    out2 = pl.pallas_call(
        _dc_kernel,
        out_shape=jax.ShapeDtypeStruct((rows, L), compute_dtype),
        grid=grid,
        in_specs=[
            pl.BlockSpec(memory_space=pltpu.MemorySpace.SMEM),   # dc_weight
            mask_spec,                                           # (compact) mask
            data_spec,                                           # k_rec
            data_spec,                                           # k_ref
        ],
        out_specs=data_spec,
        # Reuse the k_rec slab's HBM allocation for the output (saves an
        # allocation; write bandwidth is unchanged).
        input_output_aliases={2: 0},
        compiler_params=cparams,
        cost_estimate=cost,
    )(w_val.reshape(1, 1), mask_slab, krec2, kref2)

    out_flat = out2.reshape(-1)
    if n_pad != n:
        out_flat = out_flat[:n]
    return out_flat.reshape(k_rec.shape)


# ---------------------------------------------------------------------------
# Main
# ---------------------------------------------------------------------------
if __name__ == "__main__":
    key = jax.random.PRNGKey(0)
    k1, k2, k3 = jax.random.split(key, 3)

    B, C, H, W = 2, 4, 16, 16
    k_rec = jax.random.normal(k1, (B, C, H, W), dtype=jnp.float32)
    k_ref = jax.random.normal(k2, (B, C, H, W), dtype=jnp.float32)
    # Mask with one fewer dim -> exercises unsqueeze(-1) + compact mask path.
    mask = (jax.random.uniform(k3, (B, C, H)) > 0.5).astype(jnp.float32)
    m = mask[..., None]
    dc_weight = jnp.array(1.0, dtype=jnp.float32)   # nn.Parameter(torch.Tensor([1]))

    force = dict(min_pallas_elems=0)                # force Pallas at test sizes

    # --- hard DC (soft=False), compact mask path ---
    out_hard = dc_layer(k_rec, mask, k_ref, soft=False, **force)
    ref_hard = (1.0 - m) * k_rec + m * k_ref

    # --- soft DC (soft=True, DC_type != ''), w = 1 ---
    out_soft = dc_layer(k_rec, mask, k_ref, dc_weight=dc_weight, soft=True, **force)
    ref_soft = (1.0 - m) * k_rec + m * k_rec * (1.0 - dc_weight) + m * k_ref * dc_weight

    # --- soft DC with a non-trivial weight (scalar SMEM path) ---
    w2 = jnp.array(0.25, dtype=jnp.float32)
    out_soft2 = dc_layer(k_rec, mask, k_ref, dc_weight=w2, soft=True, **force)
    ref_soft2 = (1.0 - m) * k_rec + m * k_rec * (1.0 - w2) + m * k_ref * w2

    # --- full-resolution mask (no trailing broadcast) -> generic mask stream ---
    mask_full = (jax.random.uniform(k3, (B, C, H, W)) > 0.5).astype(jnp.float32)
    out_full = dc_layer(k_rec, mask_full, k_ref, soft=False, **force)
    ref_full = (1.0 - mask_full) * k_rec + mask_full * k_ref

    # --- multi-tile pipelined grid (evenly dividing rows) ---
    B2, C2, H2, W2 = 2, 4, 32, 32
    ka = jax.random.normal(k1, (B2, C2, H2, W2), dtype=jnp.float32)
    kb = jax.random.normal(k2, (B2, C2, H2, W2), dtype=jnp.float32)
    mg = (jax.random.uniform(k3, (B2, C2, H2)) > 0.5).astype(jnp.float32)
    out_grid = dc_layer(ka, mg, kb, soft=False, lane_width=128, tile_rows=16, **force)
    ref_grid = (1.0 - mg[..., None]) * ka + mg[..., None] * kb

    # --- multi-tile grid with a partial (masked) last block ---
    out_part = dc_layer(ka, mg, kb, soft=False, lane_width=128, tile_rows=24, **force)

    # --- ragged element count -> tail padding path ---
    kc = jax.random.normal(k1, (2, 3, 5, 16), dtype=jnp.float32)
    kd = jax.random.normal(k2, (2, 3, 5, 16), dtype=jnp.float32)
    mr = (jax.random.uniform(k3, (2, 3, 5)) > 0.5).astype(jnp.float32)
    out_rag = dc_layer(kc, mr, kd, soft=False, **force)
    ref_rag = (1.0 - mr[..., None]) * kc + mr[..., None] * kd

    # --- small-input fallback (default threshold -> fused jnp path) ---
    out_fb = dc_layer(k_rec, mask, k_ref, soft=False)

    for o in (out_hard, out_soft, out_soft2, out_full, out_grid, out_part,
              out_rag, out_fb):
        jax.block_until_ready(o)

    assert jnp.allclose(out_hard, ref_hard, atol=1e-5)
    assert jnp.allclose(out_soft, ref_soft, atol=1e-5)
    assert jnp.allclose(out_soft2, ref_soft2, atol=1e-5)
    assert jnp.allclose(out_full, ref_full, atol=1e-5)
    assert jnp.allclose(out_grid, ref_grid, atol=1e-5)
    assert jnp.allclose(out_part, ref_grid, atol=1e-5)
    assert jnp.allclose(out_rag, ref_rag, atol=1e-5)
    assert jnp.allclose(out_fb, ref_hard, atol=1e-5)

    print("KERNEL_OK")
</pallas_src>

<mosaic_0001>
module attributes {stable_mosaic.version = 11 : i64} {
  func.func @_dc_kernel(%arg0: i32, %arg1: memref<1x1xf32, #tpu.memory_space<smem>>, %arg2: memref<4x32xf32, #tpu.memory_space<vmem>>, %arg3: memref<4x512xf32, #tpu.memory_space<vmem>>, %arg4: memref<4x512xf32, #tpu.memory_space<vmem>>, %arg5: memref<4x512xf32, #tpu.memory_space<vmem>>) attributes {dimension_semantics = [#tpu.dimension_semantics<parallel>], iteration_bounds = array<i64: 1>, scalar_prefetch = 0 : i64, scratch_operands = 0 : i64, tpu.core_type = #tpu.core_type<tc>, window_params = [{transform_indices = @transform_0, window_bounds = array<i64: 1, 1>}, {transform_indices = @transform_1, window_bounds = array<i64: 4, 32>}, {transform_indices = @transform_2, window_bounds = array<i64: 4, 512>}, {transform_indices = @transform_3, window_bounds = array<i64: 4, 512>}, {transform_indices = @transform_4, window_bounds = array<i64: 4, 512>}]} {
    %c0 = arith.constant 0 : index
    %c0_0 = arith.constant 0 : index
    %0 = vector.load %arg3[%c0, %c0_0] : memref<4x512xf32, #tpu.memory_space<vmem>>, vector<4x512xf32>
    %c0_1 = arith.constant 0 : index
    %c0_2 = arith.constant 0 : index
    %1 = vector.load %arg4[%c0_1, %c0_2] : memref<4x512xf32, #tpu.memory_space<vmem>>, vector<4x512xf32>
    %c0_3 = arith.constant 0 : index
    %c0_4 = arith.constant 0 : index
    %2 = memref.load %arg1[%c0_3, %c0_4] : memref<1x1xf32, #tpu.memory_space<smem>>
    %c0_5 = arith.constant 0 : index
    %c0_6 = arith.constant 0 : index
    %3 = vector.load %arg2[%c0_5, %c0_6] : memref<4x32xf32, #tpu.memory_space<vmem>>, vector<4x32xf32>
    %4 = vector.broadcast %2 : f32 to vector<4x32xf32>
    %5 = arith.mulf %3, %4 : vector<4x32xf32>
    %6 = tpu.iota {dimensions = array<i32: 0>} : vector<32x512xi32>
    %7 = tpu.iota {dimensions = array<i32: 1>} : vector<32x512xi32>
    %c16_i32 = arith.constant 16 : i32
    %8 = vector.broadcast %c16_i32 : i32 to vector<32x512xi32>
    %9 = arith.muli %6, %8 : vector<32x512xi32>
    %10 = arith.cmpi sge, %7, %9 : vector<32x512xi32>
    %c16_i32_7 = arith.constant 16 : i32
    %11 = vector.broadcast %c16_i32_7 : i32 to vector<32x512xi32>
    %12 = arith.addi %9, %11 : vector<32x512xi32>
    %13 = arith.cmpi slt, %7, %12 : vector<32x512xi32>
    %14 = arith.andi %10, %13 : vector<32x512xi1>
    %15 = arith.extui %14 : vector<32x512xi1> to vector<32x512xi32>
    %16 = arith.sitofp %15 : vector<32x512xi32> to vector<32x512xf32>
    %cst = arith.constant dense<0.000000e+00> : vector<4x512xf32>
    %17 = tpu.matmul %5, %16, %cst {dimension_numbers = #tpu.dot_dimension_numbers<[1], [0], [0], [1], [0, 0, 1, 1], [], []>} : vector<4x32xf32>, vector<32x512xf32>, vector<4x512xf32> -> vector<4x512xf32>
    %18 = arith.subf %1, %0 : vector<4x512xf32>
    %19 = arith.mulf %17, %18 : vector<4x512xf32>
    %20 = arith.addf %0, %19 : vector<4x512xf32>
    %c0_8 = arith.constant 0 : index
    %c0_9 = arith.constant 0 : index
    %21 = vector.load %arg5[%c0_8, %c0_9] : memref<4x512xf32, #tpu.memory_space<vmem>>, vector<4x512xf32>
    tpu.vector_store %arg5[%c0_8, %c0_9], %20 {strides = array<i32>} : memref<4x512xf32, #tpu.memory_space<vmem>>, vector<4x512xf32>,
    return
  }
  func.func @transform_0(%arg0: i32) -> (i32, i32) {
    %c0_i32 = arith.constant 0 : i32
    %c0_i32_0 = arith.constant 0 : i32
    %c0_i32_1 = arith.constant 0 : i32
    return %c0_i32, %c0_i32_0 : i32, i32
  }
  func.func @transform_1(%arg0: i32) -> (i32, i32) {
    %c0_i32 = arith.constant 0 : i32
    %c0_i32_0 = arith.constant 0 : i32
    return %arg0, %c0_i32 : i32, i32
  }
  func.func @transform_2(%arg0: i32) -> (i32, i32) {
    %c0_i32 = arith.constant 0 : i32
    %c0_i32_0 = arith.constant 0 : i32
    return %arg0, %c0_i32 : i32, i32
  }
  func.func @transform_3(%arg0: i32) -> (i32, i32) {
    %c0_i32 = arith.constant 0 : i32
    %c0_i32_0 = arith.constant 0 : i32
    return %arg0, %c0_i32 : i32, i32
  }
  func.func @transform_4(%arg0: i32) -> (i32, i32) {
    %c0_i32 = arith.constant 0 : i32
    %c0_i32_0 = arith.constant 0 : i32
    return %arg0, %c0_i32 : i32, i32
  }
}

</mosaic_0001>

<llo_original>
// kernel: tpu_custom_call.1
$region0: #{tpu_custom_call.1}
  #allocation0 [shape = 'u32[]', space=smem, size = 0x4, offset = 0x4, fixed_abs, tag = 'smem constant byte address 0x4 - core index']
  #allocation1 [shape = 'u32[144,128]{1,0:T(1,128)}', space=vmem, size = 0x12000, scoped, tag = 'internal scratch']
  #allocation2 [shape = 'f32[1,1]{1,0:T(1,128)S(6)}', space=smem, size = 0x200, scoped, tag = 'scoped memory for tpu_custom_call.1']
  %s0 = inlined_call_operand.<no memory space> [shape: f32[1,1], index: 0, kind: input, shape index: {}]
  %s1 = inlined_call_operand.vmem [shape: f32[4,32], index: 1, kind: input, shape index: {}]
  %s2 = inlined_call_operand.hbm [shape: f32[4,512], index: 2, kind: input, shape index: {}, may-alias: {2,4}]
  %s3 = inlined_call_operand.vmem [shape: f32[4,512], index: 3, kind: input, shape index: {}]
  %s4 = inlined_call_operand.hbm [shape: f32[4,512], index: 4, kind: output, shape index: {}, may-alias: {2,4}]
  %s5 = sld [smem:[#allocation0]]
  $region30: #{tpu_custom_call.1} parent=0
    _
  %s7 = ssub.s32 1, %s5
  %s8 = scalar_select 0, %s7, %s5
  %9 = sst [smem:[#allocation2]] %s0
  $region1: #{tpu_custom_call.1} parent=0
    #allocation3 [shape = 'u8[8192]{0}', space=vmem, size = 0x2000, scoped, tag = 'input window, operand 2, single buffered']
    #allocation4 [shape = 's32[1]{0}', space=sflag, size = 0x4, scoped, tag = 'scoped memory for tpu_custom_call.1']
    #allocation5 [shape = 's32[1]{0}', space=sflag, size = 0x4, scoped, tag = 'scoped memory for tpu_custom_call.1']
    #allocation6 [shape = 'u8[8192]{0}', space=vmem, size = 0x2000, scoped, tag = 'output window, operand 0, single buffered']
    %10 = vsyncpa [#allocation4], 0
    %11 = vsyncpa [#allocation5], 0
    // Predicated region
    $region2: #{tpu_custom_call.1} parent=1 // pred_check
      _
    $region3: #{tpu_custom_call.1} parent=1 // pred_check_branch
      %13 = sbr.rel (0) target = $region5
    $region4: #{tpu_custom_call.1} parent=1 // pred_region
      _
    $region5: #{tpu_custom_call.1} parent=1 // pred_fallthru
      _
    // Predicated region
    $region6: #{tpu_custom_call.1} parent=1 // pred_check
      _
    $region7: #{tpu_custom_call.1} parent=1 // pred_check_branch
      %15 = sbr.rel (0) target = $region9
    $region8: #{tpu_custom_call.1} parent=1 // pred_region
      _
    $region9: #{tpu_custom_call.1} parent=1 // pred_fallthru
      _
    // Predicated region
    $region10: #{tpu_custom_call.1} parent=1 // pred_check
      _
    $region11: #{tpu_custom_call.1} parent=1 // pred_check_branch
      %17 = sbr.rel (0) target = $region13
    $region12: #{tpu_custom_call.1} parent=1 // pred_region
      %s19 = ssub.s32 256, 256
      %20 = vsyncadd [#allocation4], %s19
      %s22 = sshll.u32 [#allocation3], 4
      %s23 = int_to_ptr.vmem [resolvable:$true] %s22
      %25 = dma.hbm_to_vmem [thread:$0]  %s2, 256, %s23, [#allocation4]
    $region13: #{tpu_custom_call.1} parent=1 // pred_fallthru
      _
    // Predicated region
    $region14: #{tpu_custom_call.1} parent=1 // pred_check
      _
    $region15: #{tpu_custom_call.1} parent=1 // pred_check_branch
      %27 = sbr.rel (0) target = $region17
    $region16: #{tpu_custom_call.1} parent=1 // pred_region
      _
    $region17: #{tpu_custom_call.1} parent=1 // pred_fallthru
      _
    // Predicated region
    $region18: #{tpu_custom_call.1} parent=1 // pred_check
      _
    $region19: #{tpu_custom_call.1} parent=1 // pred_check_branch
      %29 = sbr.rel (0) target = $region21
    $region20: #{tpu_custom_call.1} parent=1 // pred_region
      %30 = dma.done [#allocation4], 256
    $region21: #{tpu_custom_call.1} parent=1 // pred_fallthru
      _
    %v31 = vld [vmem:[#allocation3] sm:$0xff]
    %v32 = vld [vmem:[#allocation3 + $0x8] sm:$0xff]
    %v33 = vld [vmem:[%s3] sm:$0xff]
    %v34 = vld [vmem:[%s3 + $0x8] sm:$0xff]
    %s35 = sld [smem:[#allocation2]]
    %v36 = vld [vmem:[%s1] sm:$0xf]
    %v37 = vstv %s35
    %v38 = vmul.f32 %v36, %v37
    %v39 = vlaneseq
    %v40 = vshrl.u32 %v39, 7
    %v41 = vadd.s32 %v40, 8
    %v42 = vadd.s32 %v40, 16
    %v43 = vadd.s32 %v40, 24
    %v44 = vlaneseq
    %v45 = vand.u32 %v44, 127
    %v46 = vadd.s32 %v45, 128
    %v47 = vadd.s32 %v45, 256
    %v48 = vadd.s32 %v45, 384
    %v49 = vmul.u32 %v40, 16
    %v50 = vmul.u32 %v41, 16
    %v51 = vmul.u32 %v42, 16
    %v52 = vmul.u32 %v43, 16
    %vm53 = vcmp.ge.s32.totalorder %v45, %v49
    %vm54 = vcmp.ge.s32.totalorder %v46, %v49
    %vm55 = vcmp.ge.s32.totalorder %v47, %v49
    %vm56 = vcmp.ge.s32.totalorder %v48, %v49
    %vm57 = vcmp.ge.s32.totalorder %v45, %v50
    %vm58 = vcmp.ge.s32.totalorder %v46, %v50
    %vm59 = vcmp.ge.s32.totalorder %v47, %v50
    %vm60 = vcmp.ge.s32.totalorder %v48, %v50
    %vm61 = vcmp.ge.s32.totalorder %v45, %v51
    %vm62 = vcmp.ge.s32.totalorder %v46, %v51
    %vm63 = vcmp.ge.s32.totalorder %v47, %v51
    %vm64 = vcmp.ge.s32.totalorder %v48, %v51
    %vm65 = vcmp.ge.s32.totalorder %v45, %v52
    %vm66 = vcmp.ge.s32.totalorder %v46, %v52
    %vm67 = vcmp.ge.s32.totalorder %v47, %v52
    %vm68 = vcmp.ge.s32.totalorder %v48, %v52
    %v69 = vadd.s32 %v49, 16
    %v70 = vadd.s32 %v50, 16
    %v71 = vadd.s32 %v51, 16
    %v72 = vadd.s32 %v52, 16
    %vm73 = vcmp.lt.s32.totalorder %v45, %v69
    %vm74 = vcmp.lt.s32.totalorder %v46, %v69
    %vm75 = vcmp.lt.s32.totalorder %v47, %v69
    %vm76 = vcmp.lt.s32.totalorder %v48, %v69
    %vm77 = vcmp.lt.s32.totalorder %v45, %v70
    %vm78 = vcmp.lt.s32.totalorder %v46, %v70
    %vm79 = vcmp.lt.s32.totalorder %v47, %v70
    %vm80 = vcmp.lt.s32.totalorder %v48, %v70
    %vm81 = vcmp.lt.s32.totalorder %v45, %v71
    %vm82 = vcmp.lt.s32.totalorder %v46, %v71
    %vm83 = vcmp.lt.s32.totalorder %v47, %v71
    %vm84 = vcmp.lt.s32.totalorder %v48, %v71
    %vm85 = vcmp.lt.s32.totalorder %v45, %v72
    %vm86 = vcmp.lt.s32.totalorder %v46, %v72
    %vm87 = vcmp.lt.s32.totalorder %v47, %v72
    %vm88 = vcmp.lt.s32.totalorder %v48, %v72
    %vm89 = vmand %vm53, %vm73
    %vm90 = vmand %vm54, %vm74
    %vm91 = vmand %vm55, %vm75
    %vm92 = vmand %vm56, %vm76
    %vm93 = vmand %vm57, %vm77
    %vm94 = vmand %vm58, %vm78
    %vm95 = vmand %vm59, %vm79
    %vm96 = vmand %vm60, %vm80
    %vm97 = vmand %vm61, %vm81
    %vm98 = vmand %vm62, %vm82
    %vm99 = vmand %vm63, %vm83
    %vm100 = vmand %vm64, %vm84
    %vm101 = vmand %vm65, %vm85
    %vm102 = vmand %vm66, %vm86
    %vm103 = vmand %vm67, %vm87
    %vm104 = vmand %vm68, %vm88
    %v105 = vsel %vm89, 1, 0
    %v106 = vsel %vm90, 1, 0
    %v107 = vsel %vm91, 1, 0
    %v108 = vsel %vm92, 1, 0
    %v109 = vsel %vm93, 1, 0
    %v110 = vsel %vm94, 1, 0
    %v111 = vsel %vm95, 1, 0
    %v112 = vsel %vm96, 1, 0
    %v113 = vsel %vm97, 1, 0
    %v114 = vsel %vm98, 1, 0
    %v115 = vsel %vm99, 1, 0
    %v116 = vsel %vm100, 1, 0
    %v117 = vsel %vm101, 1, 0
    %v118 = vsel %vm102, 1, 0
    %v119 = vsel %vm103, 1, 0
    %v120 = vsel %vm104, 1, 0
    %v121 = vcvt.s32.f32 %v105
    %v122 = vcvt.s32.f32 %v106
    %v123 = vcvt.s32.f32 %v107
    %v124 = vcvt.s32.f32 %v108
    %v125 = vcvt.s32.f32 %v109
    %v126 = vcvt.s32.f32 %v110
    %v127 = vcvt.s32.f32 %v111
    %v128 = vcvt.s32.f32 %v112
    %v129 = vcvt.s32.f32 %v113
    %v130 = vcvt.s32.f32 %v114
    %v131 = vcvt.s32.f32 %v115
    %v132 = vcvt.s32.f32 %v116
    %v133 = vcvt.s32.f32 %v117
    %v134 = vcvt.s32.f32 %v118
    %v135 = vcvt.s32.f32 %v119
    %v136 = vcvt.s32.f32 %v120
    %vm137 = vcmask 261120
    %v139 = vsel %vm137, %v38, 0
    %141 = vmatprep.subr.mxu0 %v122
    %142 = vmatpush1.msra.mxu0 %v121
    %143 = vmatprep.subr.mxu0 %v126
    %144 = vmatpush1.msra.mxu0 %v125
    %145 = vmatprep.subr.mxu0 %v130
    %146 = vmatpush1.msra.mxu0 %v129
    %147 = vmatprep.subr.mxu0 %v134
    %148 = vmatpush1.msra.mxu0 %v133
    %149 = vmatprep.subr.mxu0 0.0
    %150 = vmatpush1.msra.mxu0 0.0
    %151 = vmatprep.subr.mxu0 0.0
    %152 = vmatpush1.msra.mxu0 0.0
    %153 = vmatprep.subr.mxu0 0.0
    %154 = vmatpush1.msra.mxu0 0.0
    %155 = vmatprep.subr.mxu0 0.0
    %156 = vmatpush1.msra.mxu0 0.0
    %157 = vmatprep.subr.mxu0 0.0
    %158 = vmatpush1.msra.mxu0 0.0
    %159 = vmatprep.subr.mxu0 0.0
    %160 = vmatpush1.msra.mxu0 0.0
    %161 = vmatprep.subr.mxu0 0.0
    %162 = vmatpush1.msra.mxu0 0.0
    %163 = vmatprep.subr.mxu0 0.0
    %164 = vmatpush1.msra.mxu0 0.0
    %165 = vmatprep.subr.mxu0 0.0
    %166 = vmatpush1.msra.mxu0 0.0
    %167 = vmatprep.subr.mxu0 0.0
    %168 = vmatpush1.msra.mxu0 0.0
    %169 = vmatprep.subr.mxu0 0.0
    %170 = vmatpush1.msra.mxu0 0.0
    %171 = vmatprep.subr.mxu0 0.0
    %172 = vmatpush1.msra.mxu0 0.0
    %173 = vmatprep.subr.mxu0 0.0
    %174 = vmatpush1.msra.mxu0 0.0
    %175 = vmatprep.subr.mxu0 0.0
    %176 = vmatpush1.msra.mxu0 0.0
    %177 = vmatprep.subr.mxu0 0.0
    %178 = vmatpush1.msra.mxu0 0.0
    %179 = vmatprep.subr.mxu0 0.0
    %180 = vmatpush1.msra.mxu0 0.0
    %181 = vmatprep.subr.mxu0 0.0
    %182 = vmatpush1.msra.mxu0 0.0
    %183 = vmatprep.subr.mxu0 0.0
    %184 = vmatpush1.msra.mxu0 0.0
    %185 = vmatprep.subr.mxu0 0.0
    %186 = vmatpush1.msra.mxu0 0.0
    %187 = vmatprep.subr.mxu0 0.0
    %188 = vmatpush1.msra.mxu0 0.0
    %189 = vmatprep.subr.mxu0 0.0
    %190 = vmatpush1.msra.mxu0 0.0
    %191 = vmatprep.subr.mxu0 0.0
    %192 = vmatpush1.msra.mxu0 0.0
    %193 = vmatprep.subr.mxu0 0.0
    %194 = vmatpush1.msra.mxu0 0.0
    %195 = vmatprep.subr.mxu0 0.0
    %196 = vmatpush1.msra.mxu0 0.0
    %197 = vmatprep.subr.mxu0 0.0
    %198 = vmatpush1.msra.mxu0 0.0
    %199 = vmatprep.subr.mxu0 0.0
    %200 = vmatpush1.msra.mxu0 0.0
    %201 = vmatprep.subr.mxu0 0.0
    %202 = vmatpush1.msra.mxu0 0.0
    %203 = vmatprep.subr.mxu0 0.0
    %204 = vmatpush1.msra.mxu0 0.0
    %205 = vmatprep.mubr.f32.mxu0 0.0
    %206 = vmatmul.mubr.f32.gmra.mrb[0].mxu0 %v139
    %v207 = vpop.f32.mrb[0].mxu0
    %v208 = vadd.f32 0.0, %v207
    %v209 = vpop.f32.mrb[0].mxu0
    %v210 = vadd.f32 0.0, %v209
    %211 = vdwg.mxu0
    %212 = vmatprep.subr.mxu0 %v124
    %213 = vmatpush1.msra.mxu0 %v123
    %214 = vmatprep.subr.mxu0 %v128
    %215 = vmatpush1.msra.mxu0 %v127
    %216 = vmatprep.subr.mxu0 %v132
    %217 = vmatpush1.msra.mxu0 %v131
    %218 = vmatprep.subr.mxu0 %v136
    %219 = vmatpush1.msra.mxu0 %v135
    %220 = vmatprep.subr.mxu0 0.0
    %221 = vmatpush1.msra.mxu0 0.0
    %222 = vmatprep.subr.mxu0 0.0
    %223 = vmatpush1.msra.mxu0 0.0
    %224 = vmatprep.subr.mxu0 0.0
    %225 = vmatpush1.msra.mxu0 0.0
    %226 = vmatprep.subr.mxu0 0.0
    %227 = vmatpush1.msra.mxu0 0.0
    %228 = vmatprep.subr.mxu0 0.0
    %229 = vmatpush1.msra.mxu0 0.0
    %230 = vmatprep.subr.mxu0 0.0
    %231 = vmatpush1.msra.mxu0 0.0
    %232 = vmatprep.subr.mxu0 0.0
    %233 = vmatpush1.msra.mxu0 0.0
    %234 = vmatprep.subr.mxu0 0.0
    %235 = vmatpush1.msra.mxu0 0.0
    %236 = vmatprep.subr.mxu0 0.0
    %237 = vmatpush1.msra.mxu0 0.0
    %238 = vmatprep.subr.mxu0 0.0
    %239 = vmatpush1.msra.mxu0 0.0
    %240 = vmatprep.subr.mxu0 0.0
    %241 = vmatpush1.msra.mxu0 0.0
    %242 = vmatprep.subr.mxu0 0.0
    %243 = vmatpush1.msra.mxu0 0.0
    %244 = vmatprep.subr.mxu0 0.0
    %245 = vmatpush1.msra.mxu0 0.0
    %246 = vmatprep.subr.mxu0 0.0
    %247 = vmatpush1.msra.mxu0 0.0
    %248 = vmatprep.subr.mxu0 0.0
    %249 = vmatpush1.msra.mxu0 0.0
    %250 = vmatprep.subr.mxu0 0.0
    %251 = vmatpush1.msra.mxu0 0.0
    %252 = vmatprep.subr.mxu0 0.0
    %253 = vmatpush1.msra.mxu0 0.0
    %254 = vmatprep.subr.mxu0 0.0
    %255 = vmatpush1.msra.mxu0 0.0
    %256 = vmatprep.subr.mxu0 0.0
    %257 = vmatpush1.msra.mxu0 0.0
    %258 = vmatprep.subr.mxu0 0.0
    %259 = vmatpush1.msra.mxu0 0.0
    %260 = vmatprep.subr.mxu0 0.0
    %261 = vmatpush1.msra.mxu0 0.0
    %262 = vmatprep.subr.mxu0 0.0
    %263 = vmatpush1.msra.mxu0 0.0
    %264 = vmatprep.subr.mxu0 0.0
    %265 = vmatpush1.msra.mxu0 0.0
    %266 = vmatprep.subr.mxu0 0.0
    %267 = vmatpush1.msra.mxu0 0.0
    %268 = vmatprep.subr.mxu0 0.0
    %269 = vmatpush1.msra.mxu0 0.0
    %270 = vmatprep.subr.mxu0 0.0
    %271 = vmatpush1.msra.mxu0 0.0
    %272 = vmatprep.subr.mxu0 0.0
    %273 = vmatpush1.msra.mxu0 0.0
    %274 = vmatprep.subr.mxu0 0.0
    %275 = vmatpush1.msra.mxu0 0.0
    %276 = vmatprep.mubr.f32.mxu0 0.0
    %277 = vmatmul.mubr.f32.gmra.mrb[0].mxu0 %v139
    %v278 = vpop.f32.mrb[0].mxu0
    %v279 = vadd.f32 0.0, %v278
    %v280 = vpop.f32.mrb[0].mxu0
    %v281 = vadd.f32 0.0, %v280
    %282 = vdwg.mxu0
    %v283 = vsub.f32 %v33, %v31
    %v284 = vsub.f32 %v34, %v32
    %v287 = vcombine.high %v283, %v283
    %v288 = vcombine.high %v284, %v284
    %v291 = vmul.f32 %v208, %v283
    %v292 = vmul.f32 %v210, %v287
    %v293 = vmul.f32 %v279, %v284
    %v294 = vmul.f32 %v281, %v288
    %v299 = vcombine.low %v291, %v292
    %v300 = vcombine.low %v293, %v294
    %v303 = vadd.f32 %v31, %v299
    %v304 = vadd.f32 %v32, %v300
    %305 = vst [vmem:[#allocation6] sm:$0xff] %v303
    %306 = vst [vmem:[#allocation6 + $0x8] sm:$0xff] %v304
    // Predicated region
    $region22: #{tpu_custom_call.1} parent=1 // pred_check
      _
    $region23: #{tpu_custom_call.1} parent=1 // pred_check_branch
      %308 = sbr.rel (0) target = $region25
    $region24: #{tpu_custom_call.1} parent=1 // pred_region
      %s310 = ssub.s32 256, 256
      %311 = vsyncadd [#allocation5], %s310
      %s313 = sshll.u32 [#allocation6], 4
      %s314 = int_to_ptr.vmem [resolvable:$true] %s313
      %316 = dma.vmem_to_hbm [thread:$0]  %s314, 256, %s4, [#allocation5]
    $region25: #{tpu_custom_call.1} parent=1 // pred_fallthru
      _
    // Predicated region
    $region26: #{tpu_custom_call.1} parent=1 // pred_check
      _
    $region27: #{tpu_custom_call.1} parent=1 // pred_check_branch
      %318 = sbr.rel (0) target = $region29
    $region28: #{tpu_custom_call.1} parent=1 // pred_region
      %319 = dma.done [#allocation5], 256
    $region29: #{tpu_custom_call.1} parent=1 // pred_fallthru
      _
    %320 = vsyncpa [#allocation4], 1
    %321 = vsyncpa [#allocation5], 1

</llo_original>
